<compile_context>
chip_gen: v5e
topology: v5e:2x2
jax: 0.10.0
libtpu: 0.0.40
codegen_flags: <defaults>
</compile_context>

<pallas_src>
import functools
import math

import jax
import jax.numpy as jnp
from jax import lax
from jax.experimental import pallas as pl
from jax.experimental.pallas import tpu as pltpu


# ---------------------------------------------------------------------------
# Tiled matmul + bias kernel:  o = x @ w + b   (f32 VMEM accumulator)
# ---------------------------------------------------------------------------
def _matmul_bias_kernel(x_ref, w_ref, b_ref, o_ref, acc_ref):
    @pl.when(pl.program_id(2) == 0)
    def _():
        acc_ref[...] = jnp.zeros_like(acc_ref)

    acc_ref[...] += jnp.dot(x_ref[...], w_ref[...],
                            preferred_element_type=jnp.float32)

    @pl.when(pl.program_id(2) == pl.num_programs(2) - 1)
    def _():
        o_ref[...] = (acc_ref[...] + b_ref[...].astype(jnp.float32)
                      ).astype(o_ref.dtype)


def _round_up(x, m):
    return ((x + m - 1) // m) * m


def _tile_and_pad(dim, target):
    """Full-dim block when small (always legal); otherwise an aligned target
    tile with the array zero-padded to a tile multiple (no ragged edge, no
    un-bounded fallback tile)."""
    if dim <= target:
        return dim, dim
    return target, _round_up(dim, target)


def matmul_bias(x, w_torch, b, *, tm_target=512, tn_target=512, tk_target=512):
    """x @ w_torch.T + b via a tiled, pipelined Pallas matmul.

    w_torch is Torch-style (out_features, in_features); it is transposed and
    cast to the activation dtype ONCE here (bf16 activations -> bf16 MXU
    operands), outside the kernel hot loop.
    """
    M, K = x.shape
    O = w_torch.shape[0]
    w = w_torch.T.astype(x.dtype)          # one-time XLA transpose + cast
    b2 = b.reshape(1, O)

    tm, Mp = _tile_and_pad(M, tm_target)   # targets are multiples of 8 / 128
    tk, Kp = _tile_and_pad(K, tk_target)
    tn, Op = _tile_and_pad(O, tn_target)

    if (Mp, Kp) != (M, K):
        x = jnp.pad(x, ((0, Mp - M), (0, Kp - K)))
    if (Kp, Op) != (K, O):
        w = jnp.pad(w, ((0, Kp - K), (0, Op - O)))
    if Op != O:
        b2 = jnp.pad(b2, ((0, 0), (0, Op - O)))

    grid = (Mp // tm, Op // tn, Kp // tk)
    itemsize = x.dtype.itemsize
    cost = pl.CostEstimate(
        flops=2 * Mp * Kp * Op,
        transcendentals=0,
        bytes_accessed=itemsize * (Mp * Kp + Kp * Op + Op + Mp * Op),
    )

    out = pl.pallas_call(
        _matmul_bias_kernel,
        out_shape=jax.ShapeDtypeStruct((Mp, Op), x.dtype),
        grid=grid,
        in_specs=[
            pl.BlockSpec((tm, tk), lambda i, j, k: (i, k)),
            pl.BlockSpec((tk, tn), lambda i, j, k: (k, j)),
            pl.BlockSpec((1, tn), lambda i, j, k: (0, j)),
        ],
        out_specs=pl.BlockSpec((tm, tn), lambda i, j, k: (i, j)),
        scratch_shapes=[pltpu.VMEM((tm, tn), jnp.float32)],
        compiler_params=pltpu.CompilerParams(
            dimension_semantics=("parallel", "parallel", "arbitrary"),
            vmem_limit_bytes=64 * 1024 * 1024),
        cost_estimate=cost,
    )(x, w, b2)

    if (Mp, Op) != (M, O):
        out = out[:M, :O]
    return out


# ---------------------------------------------------------------------------
# Multi-head attention kernel: one (batch, L-tile) per grid step; all H heads
# handled inside with static lane slices of the lane-dense (.., E) blocks.
# ---------------------------------------------------------------------------
def _attention_body(q_ref, k_ref, v_ref, o_ref, w_ref, *, num_heads, scale):
    H = num_heads
    q = q_ref[0]                      # (tl, E) in the input dtype (bf16 stays bf16)
    k = k_ref[0]                      # (S,  E)
    v = v_ref[0]                      # (S,  E)
    E = q.shape[-1]
    d = E // H

    w_sum = None
    for h in range(H):
        cols = slice(h * d, (h + 1) * d)
        # QK^T with operands in the input dtype (full-rate MXU for bf16),
        # f32 accumulation; scale folded into the f32 scores.
        s = lax.dot_general(q[:, cols], k[:, cols], (((1,), (1,)), ((), ())),
                            preferred_element_type=jnp.float32) * scale
        m = jnp.max(s, axis=-1, keepdims=True)
        e = jnp.exp(s - m)
        denom = jnp.sum(e, axis=-1, keepdims=True)
        # EUP reciprocal seed + ONE Newton-Raphson step (~f32 accurate);
        # keeps the divide off the VALU.
        inv = pl.reciprocal(denom, approx=True)
        inv = inv * (2.0 - denom * inv)
        p = e * inv                                           # (tl, S)
        oh = jnp.dot(p.astype(v.dtype), v[:, cols],
                     preferred_element_type=jnp.float32)      # (tl, d)
        # Write each head straight into the output block: no concat, no
        # long-lived per-head partials.
        o_ref[0, :, cols] = oh.astype(o_ref.dtype)
        if w_ref is not None:
            w_sum = p if w_sum is None else w_sum + p
    if w_ref is not None:
        w_ref[0] = (w_sum * (1.0 / H)).astype(w_ref.dtype)


def _attn_kernel_w(q_ref, k_ref, v_ref, o_ref, w_ref, *, num_heads, scale):
    _attention_body(q_ref, k_ref, v_ref, o_ref, w_ref,
                    num_heads=num_heads, scale=scale)


def _attn_kernel_nw(q_ref, k_ref, v_ref, o_ref, *, num_heads, scale):
    _attention_body(q_ref, k_ref, v_ref, o_ref, None,
                    num_heads=num_heads, scale=scale)


def _pick_seq_tile(L, target=256):
    """Largest multiple-of-8 divisor of L that is <= target (or L itself)."""
    if L <= target:
        return L
    t = (target // 8) * 8
    while t >= 8:
        if L % t == 0:
            return t
        t -= 8
    return L


def _batched_attention(qb, kb, vb, *, num_heads, scale, need_weights):
    """qb: (N, L, E); kb, vb: (N, S, E). Returns ((N, L, E), (N, L, S)|None)."""
    N, L, E = qb.shape
    S = kb.shape[1]
    H = num_heads
    d = E // H
    tl = _pick_seq_tile(L)
    grid = (N, L // tl)

    itemsize = qb.dtype.itemsize
    bytes_accessed = itemsize * (2 * N * L * E + 2 * N * S * E)
    if need_weights:
        bytes_accessed += itemsize * N * L * S
    cost = pl.CostEstimate(
        flops=4 * N * H * L * S * d,
        transcendentals=N * H * L * S,
        bytes_accessed=bytes_accessed,
    )

    in_specs = [
        pl.BlockSpec((1, tl, E), lambda n, l: (n, l, 0)),
        pl.BlockSpec((1, S, E), lambda n, l: (n, 0, 0)),   # K/V stay resident
        pl.BlockSpec((1, S, E), lambda n, l: (n, 0, 0)),   # across the l axis
    ]
    cparams = pltpu.CompilerParams(
        dimension_semantics=("parallel", "parallel"),
        vmem_limit_bytes=64 * 1024 * 1024)

    if need_weights:
        out, w = pl.pallas_call(
            functools.partial(_attn_kernel_w, num_heads=H, scale=scale),
            grid=grid,
            in_specs=in_specs,
            out_specs=[
                pl.BlockSpec((1, tl, E), lambda n, l: (n, l, 0)),
                pl.BlockSpec((1, tl, S), lambda n, l: (n, l, 0)),
            ],
            out_shape=[
                jax.ShapeDtypeStruct((N, L, E), qb.dtype),
                jax.ShapeDtypeStruct((N, L, S), qb.dtype),
            ],
            compiler_params=cparams,
            cost_estimate=cost,
        )(qb, kb, vb)
        return out, w

    out = pl.pallas_call(
        functools.partial(_attn_kernel_nw, num_heads=H, scale=scale),
        grid=grid,
        in_specs=in_specs,
        out_specs=pl.BlockSpec((1, tl, E), lambda n, l: (n, l, 0)),
        out_shape=jax.ShapeDtypeStruct((N, L, E), qb.dtype),
        compiler_params=cparams,
        cost_estimate=cost,
    )(qb, kb, vb)
    return out, None


# ---------------------------------------------------------------------------
# Forward pass (matches F.multi_head_attention_forward with dropout=0,
# no bias_kv, no zero_attn, no masks).
# ---------------------------------------------------------------------------
def multihead_attention(query, key, value, *, in_proj_weight, in_proj_bias,
                        out_proj_weight, out_proj_bias, num_heads,
                        need_weights=True):
    L, N, E = query.shape
    S = key.shape[0]
    H = num_heads
    d = E // H
    scale = 1.0 / math.sqrt(d)

    q2 = query.reshape(L * N, E)
    if query is key and key is value:
        # Self-attention: single fused (M, E) @ (E, 3E) projection.
        qkv = matmul_bias(q2, in_proj_weight, in_proj_bias)
        q, k, v = qkv[:, :E], qkv[:, E:2 * E], qkv[:, 2 * E:]
    elif key is value:
        # Shared memory (cross-attention): fuse the K and V projections.
        q = matmul_bias(q2, in_proj_weight[:E], in_proj_bias[:E])
        kv = matmul_bias(key.reshape(S * N, E),
                         in_proj_weight[E:], in_proj_bias[E:])
        k, v = kv[:, :E], kv[:, E:]
    else:
        q = matmul_bias(q2, in_proj_weight[:E], in_proj_bias[:E])
        k = matmul_bias(key.reshape(S * N, E),
                        in_proj_weight[E:2 * E], in_proj_bias[E:2 * E])
        v = matmul_bias(value.reshape(S * N, E),
                        in_proj_weight[2 * E:], in_proj_bias[2 * E:])

    # Batch-major, head-packed (lane-dense) layout for the attention kernel.
    # Kept as explicit XLA transposes: a BlockSpec absorbing them would need a
    # sublane-size-1 block over the N axis, which breaks the (8,128) rule.
    qb = q.reshape(L, N, E).transpose(1, 0, 2)
    kb = k.reshape(S, N, E).transpose(1, 0, 2)
    vb = v.reshape(S, N, E).transpose(1, 0, 2)

    attn_out, attn_w = _batched_attention(
        qb, kb, vb, num_heads=H, scale=scale, need_weights=need_weights)

    # (N, L, E) -> (L, N, E) -> output projection.
    attn_out = attn_out.transpose(1, 0, 2).reshape(L * N, E)
    out = matmul_bias(attn_out, out_proj_weight, out_proj_bias).reshape(L, N, E)
    return out, attn_w


# ---------------------------------------------------------------------------
# Pure-JAX reference for correctness checks.
# ---------------------------------------------------------------------------
def reference(query, key, value, *, in_proj_weight, in_proj_bias,
              out_proj_weight, out_proj_bias, num_heads):
    L, N, E = query.shape
    S = key.shape[0]
    H = num_heads
    d = E // H
    scale = 1.0 / math.sqrt(d)
    w_q, w_k, w_v = in_proj_weight[:E], in_proj_weight[E:2 * E], in_proj_weight[2 * E:]
    b_q, b_k, b_v = in_proj_bias[:E], in_proj_bias[E:2 * E], in_proj_bias[2 * E:]
    q = (query @ w_q.T + b_q) * scale
    k = key @ w_k.T + b_k
    v = value @ w_v.T + b_v
    q = q.reshape(L, N * H, d).transpose(1, 0, 2)
    k = k.reshape(S, N * H, d).transpose(1, 0, 2)
    v = v.reshape(S, N * H, d).transpose(1, 0, 2)
    s = jnp.einsum('bld,bsd->bls', q, k)
    p = jax.nn.softmax(s, axis=-1)
    o = jnp.einsum('bls,bsd->bld', p, v)
    o = o.transpose(1, 0, 2).reshape(L, N, E)
    out = o @ out_proj_weight.T + out_proj_bias
    return out, p.reshape(N, H, L, S).mean(axis=1)


if __name__ == "__main__":
    # Small shapes: tgt seq=8, src seq=16, batch=2, embed=32, heads=4 (d=8).
    L, S, N, E, H = 8, 16, 2, 32, 4
    root = jax.random.PRNGKey(0)
    k_q, k_k, k_v, k_w, k_o = jax.random.split(root, 5)

    query = jax.random.normal(k_q, (L, N, E), dtype=jnp.float32)
    key = jax.random.normal(k_k, (S, N, E), dtype=jnp.float32)
    value = jax.random.normal(k_v, (S, N, E), dtype=jnp.float32)

    # Deterministic parameter init (mirrors _reset_parameters shapes).
    xav_bound = math.sqrt(6.0 / (E + 3 * E))
    in_proj_weight = jax.random.uniform(k_w, (3 * E, E), jnp.float32,
                                        minval=-xav_bound, maxval=xav_bound)
    in_proj_bias = jnp.zeros((3 * E,), jnp.float32)
    lin_bound = 1.0 / math.sqrt(E)
    out_proj_weight = jax.random.uniform(k_o, (E, E), jnp.float32,
                                         minval=-lin_bound, maxval=lin_bound)
    out_proj_bias = jnp.zeros((E,), jnp.float32)

    params = dict(in_proj_weight=in_proj_weight, in_proj_bias=in_proj_bias,
                  out_proj_weight=out_proj_weight, out_proj_bias=out_proj_bias,
                  num_heads=H)

    def check(out, w, ref_out, ref_w, atol=1e-4, rtol=1e-4):
        assert out.shape == ref_out.shape
        assert jnp.allclose(out.astype(jnp.float32), ref_out, atol=atol, rtol=rtol)
        assert w.shape == ref_w.shape
        assert jnp.allclose(w.astype(jnp.float32), ref_w, atol=atol, rtol=rtol)

    # 1) General cross-attention (distinct q/k/v -> separate projections).
    out1, w1 = multihead_attention(query, key, value, **params)
    out1 = jax.block_until_ready(out1)
    w1 = jax.block_until_ready(w1)
    ref_out1, ref_w1 = reference(query, key, value, **params)
    check(out1, w1, ref_out1, ref_w1)

    # 2) key is value (fused KV projection path).
    out2, w2 = multihead_attention(query, key, key, **params)
    out2 = jax.block_until_ready(out2)
    ref_out2, ref_w2 = reference(query, key, key, **params)
    check(out2, w2, ref_out2, ref_w2)

    # 3) Self-attention (fused QKV projection path).
    out3, w3 = multihead_attention(query, query, query, **params)
    out3 = jax.block_until_ready(out3)
    ref_out3, ref_w3 = reference(query, query, query, **params)
    check(out3, w3, ref_out3, ref_w3)

    # 4) need_weights=False: skips the (N, L, S) HBM writeback entirely.
    out4, w4 = multihead_attention(query, key, value, need_weights=False,
                                   **params)
    out4 = jax.block_until_ready(out4)
    assert w4 is None
    assert jnp.allclose(out4, ref_out1, atol=1e-4, rtol=1e-4)

    # 5) bf16 inputs: bf16 MXU operands / f32 accumulation path (loose tol).
    out5, w5 = multihead_attention(query.astype(jnp.bfloat16),
                                   key.astype(jnp.bfloat16),
                                   value.astype(jnp.bfloat16), **params)
    out5 = jax.block_until_ready(out5)
    assert out5.dtype == jnp.bfloat16
    check(out5, w5, ref_out1, ref_w1, atol=6e-2, rtol=6e-2)

    print("KERNEL_OK")
</pallas_src>

<mosaic_0001>
module attributes {stable_mosaic.version = 11 : i64} {
  func.func @_matmul_bias_kernel(%arg0: i32, %arg1: i32, %arg2: i32, %arg3: memref<16x32xf32, #tpu.memory_space<vmem>>, %arg4: memref<32x32xf32, #tpu.memory_space<vmem>>, %arg5: memref<1x32xf32, #tpu.memory_space<vmem>>, %arg6: memref<16x32xf32, #tpu.memory_space<vmem>>, %arg7: memref<16x32xf32, #tpu.memory_space<vmem>>) attributes {dimension_semantics = [#tpu.dimension_semantics<parallel>, #tpu.dimension_semantics<parallel>, #tpu.dimension_semantics<arbitrary>], iteration_bounds = array<i64: 1, 1, 1>, scalar_prefetch = 0 : i64, scratch_operands = 1 : i64, tpu.core_type = #tpu.core_type<tc>, window_params = [{transform_indices = @transform_0, window_bounds = array<i64: 16, 32>}, {transform_indices = @transform_1, window_bounds = array<i64: 32, 32>}, {transform_indices = @transform_2, window_bounds = array<i64: 1, 32>}, {transform_indices = @transform_3, window_bounds = array<i64: 16, 32>}]} {
    %c0_i32 = arith.constant 0 : i32
    %0 = arith.cmpi eq, %arg2, %c0_i32 : i32
    %1 = arith.extui %0 : i1 to i32
    %c0_i32_0 = arith.constant 0 : i32
    %2 = arith.cmpi ne, %1, %c0_i32_0 : i32
    scf.if %2 {
      %cst_10 = arith.constant 0.000000e+00 : f32
      %12 = vector.broadcast %cst_10 : f32 to vector<16x32xf32>
      %c0_11 = arith.constant 0 : index
      %c0_12 = arith.constant 0 : index
      %13 = vector.load %arg7[%c0_11, %c0_12] : memref<16x32xf32, #tpu.memory_space<vmem>>, vector<16x32xf32>
      tpu.vector_store %arg7[%c0_11, %c0_12], %12 {strides = array<i32>} : memref<16x32xf32, #tpu.memory_space<vmem>>, vector<16x32xf32>,
    } else {
    }
    %c0 = arith.constant 0 : index
    %c0_1 = arith.constant 0 : index
    %3 = vector.load %arg7[%c0, %c0_1] : memref<16x32xf32, #tpu.memory_space<vmem>>, vector<16x32xf32>
    %c0_2 = arith.constant 0 : index
    %c0_3 = arith.constant 0 : index
    %4 = vector.load %arg3[%c0_2, %c0_3] : memref<16x32xf32, #tpu.memory_space<vmem>>, vector<16x32xf32>
    %c0_4 = arith.constant 0 : index
    %c0_5 = arith.constant 0 : index
    %5 = vector.load %arg4[%c0_4, %c0_5] : memref<32x32xf32, #tpu.memory_space<vmem>>, vector<32x32xf32>
    %cst = arith.constant dense<0.000000e+00> : vector<16x32xf32>
    %6 = tpu.matmul %4, %5, %cst {dimension_numbers = #tpu.dot_dimension_numbers<[1], [0], [0], [1], [0, 0, 1, 1], [], []>} : vector<16x32xf32>, vector<32x32xf32>, vector<16x32xf32> -> vector<16x32xf32>
    %7 = arith.addf %3, %6 : vector<16x32xf32>
    %c0_6 = arith.constant 0 : index
    %c0_7 = arith.constant 0 : index
    %8 = vector.load %arg7[%c0_6, %c0_7] : memref<16x32xf32, #tpu.memory_space<vmem>>, vector<16x32xf32>
    tpu.vector_store %arg7[%c0_6, %c0_7], %7 {strides = array<i32>} : memref<16x32xf32, #tpu.memory_space<vmem>>, vector<16x32xf32>,
    %c0_i32_8 = arith.constant 0 : i32
    %9 = arith.cmpi eq, %arg2, %c0_i32_8 : i32
    %10 = arith.extui %9 : i1 to i32
    %c0_i32_9 = arith.constant 0 : i32
    %11 = arith.cmpi ne, %10, %c0_i32_9 : i32
    scf.if %11 {
      %c0_10 = arith.constant 0 : index
      %c0_11 = arith.constant 0 : index
      %12 = vector.load %arg7[%c0_10, %c0_11] : memref<16x32xf32, #tpu.memory_space<vmem>>, vector<16x32xf32>
      %c0_12 = arith.constant 0 : index
      %c0_13 = arith.constant 0 : index
      %13 = vector.load %arg5[%c0_12, %c0_13] : memref<1x32xf32, #tpu.memory_space<vmem>>, vector<1x32xf32>
      %14 = vector.broadcast %13 : vector<1x32xf32> to vector<16x32xf32>
      %15 = arith.addf %12, %14 : vector<16x32xf32>
      %c0_14 = arith.constant 0 : index
      %c0_15 = arith.constant 0 : index
      %16 = vector.load %arg6[%c0_14, %c0_15] : memref<16x32xf32, #tpu.memory_space<vmem>>, vector<16x32xf32>
      tpu.vector_store %arg6[%c0_14, %c0_15], %15 {strides = array<i32>} : memref<16x32xf32, #tpu.memory_space<vmem>>, vector<16x32xf32>,
    } else {
    }
    return
  }
  func.func @transform_0(%arg0: i32, %arg1: i32, %arg2: i32) -> (i32, i32) {
    %c0_i32 = arith.constant 0 : i32
    return %arg0, %arg2 : i32, i32
  }
  func.func @transform_1(%arg0: i32, %arg1: i32, %arg2: i32) -> (i32, i32) {
    %c0_i32 = arith.constant 0 : i32
    return %arg2, %arg1 : i32, i32
  }
  func.func @transform_2(%arg0: i32, %arg1: i32, %arg2: i32) -> (i32, i32) {
    %c0_i32 = arith.constant 0 : i32
    %c0_i32_0 = arith.constant 0 : i32
    return %c0_i32, %arg1 : i32, i32
  }
  func.func @transform_3(%arg0: i32, %arg1: i32, %arg2: i32) -> (i32, i32) {
    %c0_i32 = arith.constant 0 : i32
    return %arg0, %arg1 : i32, i32
  }
}

</mosaic_0001>

<llo_original>
// kernel: tpu_custom_call.1
$region0: #{tpu_custom_call.1}
  #allocation0 [shape = 'u32[]', space=smem, size = 0x4, offset = 0x4, fixed_abs, tag = 'smem constant byte address 0x4 - core index']
  #allocation1 [shape = 'u32[72,128]{1,0:T(1,128)}', space=vmem, size = 0x9000, scoped, tag = 'internal scratch']
  #allocation2 [shape = 'f32[16,32]{1,0:T(8,128)}', space=vmem, size = 0x2000, scoped, tag = 'scratch operand']
  %s0 = inlined_call_operand.hbm [shape: f32[16,32], index: 0, kind: input, shape index: {}]
  %s1 = inlined_call_operand.hbm [shape: f32[32,32], index: 1, kind: input, shape index: {}]
  %s2 = inlined_call_operand.vmem [shape: f32[1,32], index: 2, kind: input, shape index: {}]
  %s3 = inlined_call_operand.hbm [shape: f32[16,32], index: 3, kind: output, shape index: {}]
  %s4 = sld [smem:[#allocation0]]
  $region38: #{tpu_custom_call.1} parent=0
    _
  %s6 = ssub.s32 1, %s4
  %s7 = scalar_select 0, %s6, %s4
  $region1: #{tpu_custom_call.1} parent=0
    #allocation3 [shape = 'u8[8192]{0}', space=vmem, size = 0x2000, scoped, tag = 'input window, operand 0, single buffered']
    #allocation4 [shape = 's32[1]{0}', space=sflag, size = 0x4, scoped, tag = 'scoped memory for tpu_custom_call.1']
    #allocation5 [shape = 's32[1]{0}', space=sflag, size = 0x4, scoped, tag = 'scoped memory for tpu_custom_call.1']
    #allocation6 [shape = 'u8[16384]{0}', space=vmem, size = 0x4000, scoped, tag = 'input window, operand 1, single buffered']
    #allocation7 [shape = 's32[1]{0}', space=sflag, size = 0x4, scoped, tag = 'scoped memory for tpu_custom_call.1']
    #allocation8 [shape = 'u8[8192]{0}', space=vmem, size = 0x2000, scoped, tag = 'output window, operand 0, single buffered']
    %8 = vsyncpa [#allocation4], 0
    %9 = vsyncpa [#allocation7], 0
    %10 = vsyncpa [#allocation5], 0
    // Predicated region
    $region2: #{tpu_custom_call.1} parent=1 // pred_check
      _
    $region3: #{tpu_custom_call.1} parent=1 // pred_check_branch
      %12 = sbr.rel (0) target = $region5
    $region4: #{tpu_custom_call.1} parent=1 // pred_region
      %14 = vsyncadd [#allocation4], 0
      %s15 = sshll.u32 %s0, 4
      %s16 = int_to_ptr.hbm [resolvable:$true] %s15
      %s17 = sshll.u32 [#allocation3], 4
      %s18 = int_to_ptr.vmem [resolvable:$true] %s17
      %23 = dma.hbm_to_vmem [thread:$0]  %s16, 256, %s18, [#allocation4], 128, 128, 8
    $region5: #{tpu_custom_call.1} parent=1 // pred_fallthru
      _
    // Predicated region
    $region6: #{tpu_custom_call.1} parent=1 // pred_check
      _
    $region7: #{tpu_custom_call.1} parent=1 // pred_check_branch
      %25 = sbr.rel (0) target = $region9
    $region8: #{tpu_custom_call.1} parent=1 // pred_region
      %27 = vsyncadd [#allocation7], 0
      %s28 = sshll.u32 %s1, 4
      %s29 = int_to_ptr.hbm [resolvable:$true] %s28
      %s30 = sshll.u32 [#allocation6], 4
      %s31 = int_to_ptr.vmem [resolvable:$true] %s30
      %36 = dma.hbm_to_vmem [thread:$0]  %s29, 512, %s31, [#allocation7], 128, 128, 8
    $region9: #{tpu_custom_call.1} parent=1 // pred_fallthru
      _
    // Predicated region
    $region10: #{tpu_custom_call.1} parent=1 // pred_check
      _
    $region11: #{tpu_custom_call.1} parent=1 // pred_check_branch
      %38 = sbr.rel (0) target = $region13
    $region12: #{tpu_custom_call.1} parent=1 // pred_region
      _
    $region13: #{tpu_custom_call.1} parent=1 // pred_fallthru
      _
    // Predicated region
    $region14: #{tpu_custom_call.1} parent=1 // pred_check
      _
    $region15: #{tpu_custom_call.1} parent=1 // pred_check_branch
      %40 = sbr.rel (0) target = $region17
    $region16: #{tpu_custom_call.1} parent=1 // pred_region
      %42 = dma.done [#allocation4], 256
    $region17: #{tpu_custom_call.1} parent=1 // pred_fallthru
      _
    // Predicated region
    $region18: #{tpu_custom_call.1} parent=1 // pred_check
      _
    $region19: #{tpu_custom_call.1} parent=1 // pred_check_branch
      %44 = sbr.rel (0) target = $region21
    $region20: #{tpu_custom_call.1} parent=1 // pred_region
      %46 = dma.done [#allocation7], 512
    $region21: #{tpu_custom_call.1} parent=1 // pred_fallthru
      _
    %p47 = scmp.eq.s32.totalorder 0, 0
    // Predicated region
    $region22: #{tpu_custom_call.1} parent=1 // pred_check
      %p48 = pneg %p47
    $region23: #{tpu_custom_call.1} parent=1 // pred_check_branch
      %50 = sbr.rel (%p48) target = $region25
    $region24: #{tpu_custom_call.1} parent=1 // pred_region
      %vm51 = vcmask 261120
      %52 = vst.msk [vmem:[#allocation2] sm:$0xff] %vm51, 0.0
      %53 = vst.msk [vmem:[#allocation2 + $0x8] sm:$0xff] %vm51, 0.0
    $region25: #{tpu_custom_call.1} parent=1 // pred_fallthru
      _
    %v54 = vld [vmem:[#allocation2] sm:$0xff]
    %v55 = vld [vmem:[#allocation2 + $0x8] sm:$0xff]
    %v56 = vld [vmem:[#allocation3] sm:$0xff]
    %v57 = vld [vmem:[#allocation3 + $0x8] sm:$0xff]
    %v58 = vld [vmem:[#allocation6] sm:$0xff]
    %v59 = vld [vmem:[#allocation6 + $0x8] sm:$0xff]
    %v60 = vld [vmem:[#allocation6 + $0x10] sm:$0xff]
    %v61 = vld [vmem:[#allocation6 + $0x18] sm:$0xff]
    %vm62 = vcmask 261120
    %v64 = vsel %vm62, %v56, 0
    %v67 = vsel %vm62, %v57, 0
    %69 = vmatpush.msra.mxu0 0.0
    %70 = vmatpush.msra.mxu0 0.0
    %71 = vmatpush.msra.mxu0 0.0
    %72 = vmatpush.msra.mxu0 0.0
    %73 = vmatpush.msra.mxu0 0.0
    %74 = vmatpush.msra.mxu0 0.0
    %75 = vmatpush.msra.mxu0 0.0
    %76 = vmatpush.msra.mxu0 0.0
    %77 = vmatpush.msra.mxu0 0.0
    %78 = vmatpush.msra.mxu0 0.0
    %79 = vmatpush.msra.mxu0 0.0
    %80 = vmatpush.msra.mxu0 0.0
    %81 = vmatpush.msra.mxu0 %v61
    %82 = vmatpush.msra.mxu0 %v60
    %83 = vmatpush.msra.mxu0 %v59
    %84 = vmatpush.msra.mxu0 %v58
    %85 = vmatmul.f32.gmra.mxu0 %v64
    %v86 = vpop.f32.mrf.mxu0
    %v87 = vadd.f32 0.0, %v86
    %88 = vmatmul.f32.gmra.mxu0 %v67
    %v89 = vpop.f32.mrf.mxu0
    %v90 = vadd.f32 0.0, %v89
    %91 = vdwg.mxu0
    %v92 = vadd.f32 %v54, %v87
    %v93 = vadd.f32 %v55, %v90
    %94 = vst.msk [vmem:[#allocation2] sm:$0xff] %vm62, %v92
    %95 = vst.msk [vmem:[#allocation2 + $0x8] sm:$0xff] %vm62, %v93
    // Predicated region
    $region26: #{tpu_custom_call.1} parent=1 // pred_check
      %p96 = pneg %p47
    $region27: #{tpu_custom_call.1} parent=1 // pred_check_branch
      %98 = sbr.rel (%p96) target = $region29
    $region28: #{tpu_custom_call.1} parent=1 // pred_region
      %v99 = vld [vmem:[#allocation2] sm:$0xff]
      %v100 = vld [vmem:[#allocation2 + $0x8] sm:$0xff]
      %v101 = vld [vmem:[%s2] sm:$0x1]
      %v103 = vperm.slane %v101, 0
      %v105 = vadd.f32 %v99, %v103
      %v106 = vadd.f32 %v100, %v103
      %107 = vst.msk [vmem:[#allocation8] sm:$0xff] %vm62, %v105
      %108 = vst.msk [vmem:[#allocation8 + $0x8] sm:$0xff] %vm62, %v106
    $region29: #{tpu_custom_call.1} parent=1 // pred_fallthru
      _
    // Predicated region
    $region30: #{tpu_custom_call.1} parent=1 // pred_check
      _
    $region31: #{tpu_custom_call.1} parent=1 // pred_check_branch
      %110 = sbr.rel (0) target = $region33
    $region32: #{tpu_custom_call.1} parent=1 // pred_region
      %112 = vsyncadd [#allocation5], 0
      %s113 = sshll.u32 [#allocation8], 4
      %s114 = int_to_ptr.vmem [resolvable:$true] %s113
      %s115 = sshll.u32 %s3, 4
      %s116 = int_to_ptr.hbm [resolvable:$true] %s115
      %121 = dma.vmem_to_hbm [thread:$0]  %s114, 256, %s116, [#allocation5], 128, 128, 8
    $region33: #{tpu_custom_call.1} parent=1 // pred_fallthru
      _
    // Predicated region
    $region34: #{tpu_custom_call.1} parent=1 // pred_check
      _
    $region35: #{tpu_custom_call.1} parent=1 // pred_check_branch
      %123 = sbr.rel (0) target = $region37
    $region36: #{tpu_custom_call.1} parent=1 // pred_region
      %125 = dma.done [#allocation5], 256
    $region37: #{tpu_custom_call.1} parent=1 // pred_fallthru
      _
    %126 = vsyncpa [#allocation4], 1
    %127 = vsyncpa [#allocation7], 1
    %128 = vsyncpa [#allocation5], 1

</llo_original>
